<compile_context>
chip_gen: v5e
topology: v5e:2x2
jax: 0.10.0
libtpu: 0.0.40
codegen_flags: <defaults>
</compile_context>

<pallas_src>
import jax
import jax.numpy as jnp
from jax.experimental import pallas as pl
from jax.experimental.pallas import tpu as pltpu


def _round_up(x, m):
    return ((x + m - 1) // m) * m


def _pick_tile(total, max_tile):
    """Largest multiple of 128 that divides `total` (a multiple of 128) and
    does not exceed max_tile (never below 128)."""
    best = 128
    t = 128
    while t <= min(total, max_tile):
        if total % t == 0:
            best = t
        t += 128
    return best


# ----------------------------- kernels --------------------------------------


def _lora_kernel_f32_out(x_ref, wt_ref, xa_ref, b_ref, bias_ref, o_ref):
    """f32 output: accumulate directly into the (K-resident) output block."""
    k = pl.program_id(2)

    @pl.when(k == 0)
    def _init():
        # LoRA right branch + bias: exactly once per (i, j) output tile.
        o_ref[...] = (jnp.dot(xa_ref[...], b_ref[...],
                              preferred_element_type=jnp.float32)
                      + bias_ref[...])

    # Base branch: x @ W^T, with W pre-transposed to (K, N) at prep time, so
    # this is a plain (tm, tk) x (tk, tn) MXU matmul (no in-kernel transpose).
    o_ref[...] += jnp.dot(x_ref[...], wt_ref[...],
                          preferred_element_type=jnp.float32)


def _lora_kernel_acc(x_ref, wt_ref, xa_ref, b_ref, bias_ref, o_ref, acc_ref):
    """Non-f32 output: accumulate in an f32 VMEM scratch, cast at the end."""
    k = pl.program_id(2)

    @pl.when(k == 0)
    def _init():
        acc_ref[...] = (jnp.dot(xa_ref[...], b_ref[...],
                                preferred_element_type=jnp.float32)
                        + bias_ref[...])

    acc_ref[...] += jnp.dot(x_ref[...], wt_ref[...],
                            preferred_element_type=jnp.float32)

    @pl.when(k == pl.num_programs(2) - 1)
    def _finalize():
        o_ref[...] = acc_ref[...].astype(o_ref.dtype)


# ----------------------------- wrapper ---------------------------------------


def prepare_lora_params(w, a, b, bias):
    """Pad + cast the static parameters ONCE, at parameter-load time.

    w:(out,in)  a:(in,rank)  b:(rank,out)  bias:(out,)
    Stored padded to lane/sublane multiples, in bf16, with W pre-transposed.
    """
    out_f, in_f = w.shape
    rank = a.shape[1]
    N = _round_up(out_f, 128)
    K = _round_up(in_f, 128)
    bf16 = jnp.bfloat16
    wt = jnp.zeros((K, N), bf16).at[:in_f, :out_f].set(w.T.astype(bf16))
    a_p = jnp.zeros((K, rank), bf16).at[:in_f, :].set(a.astype(bf16))
    b_p = jnp.zeros((rank, N), bf16).at[:, :out_f].set(b.astype(bf16))
    bias_p = jnp.zeros((1, N), jnp.float32).at[0, :out_f].set(
        bias.astype(jnp.float32))
    return {"wt": wt, "a": a_p, "b": b_p, "bias": bias_p,
            "in_f": in_f, "out_f": out_f, "rank": rank, "K": K, "N": N}


def lora_linear_apply(params, x, *, tm=256, tn=512, tk=1024):
    """y = x @ (W + (A@B).T).T + bias, using pre-padded params."""
    batch, in_f = x.shape
    assert in_f == params["in_f"], "in_features mismatch"
    out_f, rank = params["out_f"], params["rank"]
    K, N = params["K"], params["N"]
    out_dtype = x.dtype
    bf16 = jnp.bfloat16

    # --- Tiles.  tm is the primary knob: W HBM traffic ~ bytes(W) * M/tm. ---
    tm = min(tm, _round_up(batch, 8))
    M = _round_up(batch, tm)
    tk = _pick_tile(K, tk)
    tn = _pick_tile(N, tn)
    # v7x megacore: if batch fits one M tile, try to give the N (parallel)
    # axis >= 2 blocks so both TensorCores get work (harmless on v5e/v6e).
    if M // tm == 1 and N // tn == 1 and N >= 256:
        tn = _pick_tile(N, N // 2)
    k_steps = K // tk

    # --- Per-call input prep: only x is padded/cast per call. ---
    if (batch, in_f) == (M, K) and x.dtype == bf16:
        x_p = x
    else:
        x_p = jnp.zeros((M, K), bf16).at[:batch, :in_f].set(x.astype(bf16))
    # LoRA left branch, precomputed once (batch x rank, tiny): avoids the
    # redundant per-K-step / per-N-tile rank matmul inside the kernel.
    xa = jnp.dot(x_p, params["a"],
                 preferred_element_type=jnp.float32).astype(bf16)

    # --- Kernel selection / scratch. ---
    use_acc = (out_dtype != jnp.float32)
    kernel = _lora_kernel_acc if use_acc else _lora_kernel_f32_out
    scratch_shapes = [pltpu.VMEM((tm, tn), jnp.float32)] if use_acc else []

    # --- BlockSpecs. ---
    w_spec_kwargs = {}
    if tm <= 64 and k_steps >= 3:
        # GEMV-like W-streaming regime: deepen the W pipeline so the DMA of
        # the dominant stream stays hidden behind the tiny per-tile compute.
        w_spec_kwargs["pipeline_mode"] = pl.Buffered(3)

    in_specs = [
        pl.BlockSpec((tm, tk), lambda i, j, k: (i, k)),            # x
        pl.BlockSpec((tk, tn), lambda i, j, k: (k, j),
                     **w_spec_kwargs),                             # W^T
        pl.BlockSpec((tm, rank), lambda i, j, k: (i, 0)),          # x @ A
        pl.BlockSpec((rank, tn), lambda i, j, k: (0, j)),          # B
        pl.BlockSpec((1, tn), lambda i, j, k: (0, j)),             # bias
    ]
    out_specs = pl.BlockSpec((tm, tn), lambda i, j, k: (i, j))

    # --- VMEM budget: double-buffered inputs/outputs + scratch.  Only raise
    # the scoped limit when the default would be exceeded. ---
    est = 2 * (tm * tk * 2 + tk * tn * 2 + tm * rank * 2 + rank * tn * 2
               + tn * 4)
    est += 2 * tm * tn * jnp.dtype(out_dtype).itemsize
    est += tm * tn * 4 if use_acc else 0
    vmem_limit = int(min(est + (8 << 20), 64 << 20)) if est > (12 << 20) else None

    out = pl.pallas_call(
        kernel,
        out_shape=jax.ShapeDtypeStruct((M, N), out_dtype),
        grid_spec=pltpu.PrefetchScalarGridSpec(
            num_scalar_prefetch=0,
            grid=(M // tm, N // tn, k_steps),
            in_specs=in_specs,
            out_specs=out_specs,
            scratch_shapes=scratch_shapes,
        ),
        compiler_params=pltpu.CompilerParams(
            dimension_semantics=("parallel", "parallel", "arbitrary"),
            vmem_limit_bytes=vmem_limit),
    )(x_p, params["wt"], xa, params["b"], params["bias"])

    return out[:batch, :out_f]


# ----------------------------- demo / checks ---------------------------------

if __name__ == "__main__":
    key = jax.random.PRNGKey(0)
    k_x, k_w, k_bias, k_a, k_b = jax.random.split(key, 5)

    batch, in_features, out_features, rank = 8, 32, 64, 16

    x = jax.random.normal(k_x, (batch, in_features), dtype=jnp.float32)
    # adapted_layer = nn.Linear(in, out): W (out, in), bias (out,)
    w = jax.random.normal(k_w, (out_features, in_features), jnp.float32) * 0.1
    bias = jax.random.normal(k_bias, (out_features,), jnp.float32) * 0.1
    # LoRA params: A (in, rank), B (rank, out), torch.randn-style init
    a = jax.random.normal(k_a, (in_features, rank), jnp.float32)
    b = jax.random.normal(k_b, (rank, out_features), jnp.float32)

    # Pad/cast static parameters ONCE (load time), then apply per call.
    params = prepare_lora_params(w, a, b, bias)
    y = lora_linear_apply(params, x)
    y = jax.block_until_ready(y)
    assert y.shape == (batch, out_features)
    assert y.dtype == jnp.float32

    # Reference 1: mirror the kernel's bf16 input precision (tight check).
    f32 = jnp.float32
    xb = x.astype(jnp.bfloat16).astype(f32)
    wb = w.astype(jnp.bfloat16).astype(f32)
    ab = a.astype(jnp.bfloat16).astype(f32)
    bb = b.astype(jnp.bfloat16).astype(f32)
    xa_ref = (xb @ ab).astype(jnp.bfloat16).astype(f32)
    y_ref_bf16 = xb @ wb.T + xa_ref @ bb + bias
    assert jnp.allclose(y, y_ref_bf16, atol=2e-2, rtol=2e-2), \
        "mismatch vs bf16-precision reference"

    # Reference 2: exact PyTorch-semantics f32 forward (loose check, since
    # the kernel runs its matmuls in bf16 with f32 accumulation).
    adapted_weight = w + (a @ b).T
    y_ref_f32 = x @ adapted_weight.T + bias
    assert jnp.allclose(y, y_ref_f32, atol=5e-1, rtol=5e-2), \
        "mismatch vs f32 reference"

    # Also exercise the non-f32-output (scratch accumulator) kernel path.
    y_bf16 = lora_linear_apply(params, x.astype(jnp.bfloat16))
    y_bf16 = jax.block_until_ready(y_bf16)
    assert y_bf16.dtype == jnp.bfloat16
    assert y_bf16.shape == (batch, out_features)
    assert jnp.allclose(y_bf16.astype(f32), y, atol=1.0, rtol=5e-2), \
        "bf16-output path mismatch vs f32-output path"

    print("KERNEL_OK")
</pallas_src>

<mosaic_0001>
module attributes {stable_mosaic.version = 11 : i64} {
  func.func @_lora_kernel_f32_out(%arg0: i32, %arg1: i32, %arg2: i32, %arg3: memref<8x128xbf16, #tpu.memory_space<vmem>>, %arg4: memref<128x128xbf16, #tpu.memory_space<vmem>>, %arg5: memref<8x16xbf16, #tpu.memory_space<vmem>>, %arg6: memref<16x128xbf16, #tpu.memory_space<vmem>>, %arg7: memref<1x128xf32, #tpu.memory_space<vmem>>, %arg8: memref<8x128xf32, #tpu.memory_space<vmem>>) attributes {dimension_semantics = [#tpu.dimension_semantics<parallel>, #tpu.dimension_semantics<parallel>, #tpu.dimension_semantics<arbitrary>], iteration_bounds = array<i64: 1, 1, 1>, scalar_prefetch = 0 : i64, scratch_operands = 0 : i64, tpu.core_type = #tpu.core_type<tc>, window_params = [{transform_indices = @transform_0, window_bounds = array<i64: 8, 128>}, {transform_indices = @transform_1, window_bounds = array<i64: 128, 128>}, {transform_indices = @transform_2, window_bounds = array<i64: 8, 16>}, {transform_indices = @transform_3, window_bounds = array<i64: 16, 128>}, {transform_indices = @transform_4, window_bounds = array<i64: 1, 128>}, {transform_indices = @transform_5, window_bounds = array<i64: 8, 128>}]} {
    %c0_i32 = arith.constant 0 : i32
    %0 = arith.cmpi eq, %arg2, %c0_i32 : i32
    %1 = arith.extui %0 : i1 to i32
    %c0_i32_0 = arith.constant 0 : i32
    %2 = arith.cmpi ne, %1, %c0_i32_0 : i32
    scf.if %2 {
      %c0_8 = arith.constant 0 : index
      %c0_9 = arith.constant 0 : index
      %9 = vector.load %arg5[%c0_8, %c0_9] : memref<8x16xbf16, #tpu.memory_space<vmem>>, vector<8x16xbf16>
      %c0_10 = arith.constant 0 : index
      %c0_11 = arith.constant 0 : index
      %10 = vector.load %arg6[%c0_10, %c0_11] : memref<16x128xbf16, #tpu.memory_space<vmem>>, vector<16x128xbf16>
      %cst_12 = arith.constant dense<0.000000e+00> : vector<8x128xf32>
      %11 = tpu.matmul %9, %10, %cst_12 {dimension_numbers = #tpu.dot_dimension_numbers<[1], [0], [0], [1], [0, 0, 1, 1], [], []>} : vector<8x16xbf16>, vector<16x128xbf16>, vector<8x128xf32> -> vector<8x128xf32>
      %c0_13 = arith.constant 0 : index
      %c0_14 = arith.constant 0 : index
      %12 = vector.load %arg7[%c0_13, %c0_14] : memref<1x128xf32, #tpu.memory_space<vmem>>, vector<1x128xf32>
      %13 = vector.broadcast %12 : vector<1x128xf32> to vector<8x128xf32>
      %14 = arith.addf %11, %13 : vector<8x128xf32>
      %c0_15 = arith.constant 0 : index
      %c0_16 = arith.constant 0 : index
      %15 = vector.load %arg8[%c0_15, %c0_16] : memref<8x128xf32, #tpu.memory_space<vmem>>, vector<8x128xf32>
      tpu.vector_store %arg8[%c0_15, %c0_16], %14 {strides = array<i32>} : memref<8x128xf32, #tpu.memory_space<vmem>>, vector<8x128xf32>,
    } else {
    }
    %c0 = arith.constant 0 : index
    %c0_1 = arith.constant 0 : index
    %3 = vector.load %arg8[%c0, %c0_1] : memref<8x128xf32, #tpu.memory_space<vmem>>, vector<8x128xf32>
    %c0_2 = arith.constant 0 : index
    %c0_3 = arith.constant 0 : index
    %4 = vector.load %arg3[%c0_2, %c0_3] : memref<8x128xbf16, #tpu.memory_space<vmem>>, vector<8x128xbf16>
    %c0_4 = arith.constant 0 : index
    %c0_5 = arith.constant 0 : index
    %5 = vector.load %arg4[%c0_4, %c0_5] : memref<128x128xbf16, #tpu.memory_space<vmem>>, vector<128x128xbf16>
    %cst = arith.constant dense<0.000000e+00> : vector<8x128xf32>
    %6 = tpu.matmul %4, %5, %cst {dimension_numbers = #tpu.dot_dimension_numbers<[1], [0], [0], [1], [0, 0, 1, 1], [], []>} : vector<8x128xbf16>, vector<128x128xbf16>, vector<8x128xf32> -> vector<8x128xf32>
    %7 = arith.addf %3, %6 : vector<8x128xf32>
    %c0_6 = arith.constant 0 : index
    %c0_7 = arith.constant 0 : index
    %8 = vector.load %arg8[%c0_6, %c0_7] : memref<8x128xf32, #tpu.memory_space<vmem>>, vector<8x128xf32>
    tpu.vector_store %arg8[%c0_6, %c0_7], %7 {strides = array<i32>} : memref<8x128xf32, #tpu.memory_space<vmem>>, vector<8x128xf32>,
    return
  }
  func.func @transform_0(%arg0: i32, %arg1: i32, %arg2: i32) -> (i32, i32) {
    %c0_i32 = arith.constant 0 : i32
    return %arg0, %arg2 : i32, i32
  }
  func.func @transform_1(%arg0: i32, %arg1: i32, %arg2: i32) -> (i32, i32) {
    %c0_i32 = arith.constant 0 : i32
    return %arg2, %arg1 : i32, i32
  }
  func.func @transform_2(%arg0: i32, %arg1: i32, %arg2: i32) -> (i32, i32) {
    %c0_i32 = arith.constant 0 : i32
    %c0_i32_0 = arith.constant 0 : i32
    return %arg0, %c0_i32 : i32, i32
  }
  func.func @transform_3(%arg0: i32, %arg1: i32, %arg2: i32) -> (i32, i32) {
    %c0_i32 = arith.constant 0 : i32
    %c0_i32_0 = arith.constant 0 : i32
    return %c0_i32, %arg1 : i32, i32
  }
  func.func @transform_4(%arg0: i32, %arg1: i32, %arg2: i32) -> (i32, i32) {
    %c0_i32 = arith.constant 0 : i32
    %c0_i32_0 = arith.constant 0 : i32
    return %c0_i32, %arg1 : i32, i32
  }
  func.func @transform_5(%arg0: i32, %arg1: i32, %arg2: i32) -> (i32, i32) {
    %c0_i32 = arith.constant 0 : i32
    return %arg0, %arg1 : i32, i32
  }
}

</mosaic_0001>

<llo_original>
// kernel: tpu_custom_call.1
$region0: #{tpu_custom_call.1}
  #allocation0 [shape = 'u32[]', space=smem, size = 0x4, offset = 0x4, fixed_abs, tag = 'smem constant byte address 0x4 - core index']
  #allocation1 [shape = 'u32[72,128]{1,0:T(1,128)}', space=vmem, size = 0x9000, scoped, tag = 'internal scratch']
  %s0 = inlined_call_operand.hbm [shape: bf16[8,128], index: 0, kind: input, shape index: {}]
  %s1 = inlined_call_operand.hbm [shape: bf16[128,128], index: 1, kind: input, shape index: {}]
  %s2 = inlined_call_operand.hbm [shape: bf16[8,16], index: 2, kind: input, shape index: {}]
  %s3 = inlined_call_operand.hbm [shape: bf16[16,128], index: 3, kind: input, shape index: {}]
  %s4 = inlined_call_operand.vmem [shape: f32[1,128], index: 4, kind: input, shape index: {}]
  %s5 = inlined_call_operand.hbm [shape: f32[8,128], index: 5, kind: output, shape index: {}]
  %s6 = sld [smem:[#allocation0]]
  $region50: #{tpu_custom_call.1} parent=0
    _
  %s8 = ssub.s32 1, %s6
  %s9 = scalar_select 0, %s8, %s6
  $region1: #{tpu_custom_call.1} parent=0
    #allocation2 [shape = 'u8[2048]{0}', space=vmem, size = 0x800, scoped, tag = 'input window, operand 0, single buffered']
    #allocation3 [shape = 's32[1]{0}', space=sflag, size = 0x4, scoped, tag = 'scoped memory for tpu_custom_call.1']
    #allocation4 [shape = 's32[1]{0}', space=sflag, size = 0x4, scoped, tag = 'scoped memory for tpu_custom_call.1']
    #allocation5 [shape = 'u8[32768]{0}', space=vmem, size = 0x8000, scoped, tag = 'input window, operand 1, single buffered']
    #allocation6 [shape = 's32[1]{0}', space=sflag, size = 0x4, scoped, tag = 'scoped memory for tpu_custom_call.1']
    #allocation7 [shape = 'u8[2048]{0}', space=vmem, size = 0x800, scoped, tag = 'input window, operand 2, single buffered']
    #allocation8 [shape = 'u8[4096]{0}', space=vmem, size = 0x1000, scoped, tag = 'input window, operand 3, single buffered']
    #allocation9 [shape = 's32[1]{0}', space=sflag, size = 0x4, scoped, tag = 'scoped memory for tpu_custom_call.1']
    #allocation10 [shape = 'u8[4096]{0}', space=vmem, size = 0x1000, scoped, tag = 'output window, operand 0, single buffered']
    %10 = vsyncpa [#allocation3], 0
    %11 = vsyncpa [#allocation6], 0
    %12 = vsyncpa [#allocation9], 0
    %13 = vsyncpa [#allocation4], 0
    // Predicated region
    $region2: #{tpu_custom_call.1} parent=1 // pred_check
      _
    $region3: #{tpu_custom_call.1} parent=1 // pred_check_branch
      %15 = sbr.rel (0) target = $region5
    $region4: #{tpu_custom_call.1} parent=1 // pred_region
      %17 = vsyncadd [#allocation3], 0
      %s19 = sshll.u32 %s0, 4
      %s20 = int_to_ptr.hbm [resolvable:$true] %s19
      %s21 = sshll.u32 [#allocation2], 4
      %s22 = int_to_ptr.vmem [resolvable:$true] %s21
      %24 = dma.hbm_to_vmem [thread:$0]  %s20, 64, %s22, [#allocation3]
    $region5: #{tpu_custom_call.1} parent=1 // pred_fallthru
      _
    // Predicated region
    $region6: #{tpu_custom_call.1} parent=1 // pred_check
      _
    $region7: #{tpu_custom_call.1} parent=1 // pred_check_branch
      %26 = sbr.rel (0) target = $region9
    $region8: #{tpu_custom_call.1} parent=1 // pred_region
      %28 = vsyncadd [#allocation6], 0
      %s29 = sshll.u32 %s1, 4
      %s30 = int_to_ptr.hbm [resolvable:$true] %s29
      %s31 = sshll.u32 [#allocation5], 4
      %s32 = int_to_ptr.vmem [resolvable:$true] %s31
      %37 = dma.hbm_to_vmem [thread:$0]  %s30, 1024, %s32, [#allocation6], 64, 64, 4
    $region9: #{tpu_custom_call.1} parent=1 // pred_fallthru
      _
    // Predicated region
    $region10: #{tpu_custom_call.1} parent=1 // pred_check
      _
    $region11: #{tpu_custom_call.1} parent=1 // pred_check_branch
      %39 = sbr.rel (0) target = $region13
    $region12: #{tpu_custom_call.1} parent=1 // pred_region
      %41 = vsyncadd [#allocation6], 0
      %s43 = sshll.u32 %s2, 4
      %s44 = int_to_ptr.hbm [resolvable:$true] %s43
      %s45 = sshll.u32 [#allocation7], 4
      %s46 = int_to_ptr.vmem [resolvable:$true] %s45
      %48 = dma.hbm_to_vmem [thread:$0]  %s44, 64, %s46, [#allocation6]
    $region13: #{tpu_custom_call.1} parent=1 // pred_fallthru
      _
    // Predicated region
    $region14: #{tpu_custom_call.1} parent=1 // pred_check
      _
    $region15: #{tpu_custom_call.1} parent=1 // pred_check_branch
      %50 = sbr.rel (0) target = $region17
    $region16: #{tpu_custom_call.1} parent=1 // pred_region
      %52 = vsyncadd [#allocation9], 0
      %s53 = sshll.u32 %s3, 4
      %s54 = int_to_ptr.hbm [resolvable:$true] %s53
      %s55 = sshll.u32 [#allocation8], 4
      %s56 = int_to_ptr.vmem [resolvable:$true] %s55
      %61 = dma.hbm_to_vmem [thread:$0]  %s54, 128, %s56, [#allocation9], 64, 64, 4
    $region17: #{tpu_custom_call.1} parent=1 // pred_fallthru
      _
    // Predicated region
    $region18: #{tpu_custom_call.1} parent=1 // pred_check
      _
    $region19: #{tpu_custom_call.1} parent=1 // pred_check_branch
      %63 = sbr.rel (0) target = $region21
    $region20: #{tpu_custom_call.1} parent=1 // pred_region
      _
    $region21: #{tpu_custom_call.1} parent=1 // pred_fallthru
      _
    // Predicated region
    $region22: #{tpu_custom_call.1} parent=1 // pred_check
      _
    $region23: #{tpu_custom_call.1} parent=1 // pred_check_branch
      %65 = sbr.rel (0) target = $region25
    $region24: #{tpu_custom_call.1} parent=1 // pred_region
      %67 = dma.done [#allocation3], 64
    $region25: #{tpu_custom_call.1} parent=1 // pred_fallthru
      _
    // Predicated region
    $region26: #{tpu_custom_call.1} parent=1 // pred_check
      _
    $region27: #{tpu_custom_call.1} parent=1 // pred_check_branch
      %69 = sbr.rel (0) target = $region29
    $region28: #{tpu_custom_call.1} parent=1 // pred_region
      %71 = dma.done [#allocation6], 1024
    $region29: #{tpu_custom_call.1} parent=1 // pred_fallthru
      _
    // Predicated region
    $region30: #{tpu_custom_call.1} parent=1 // pred_check
      _
    $region31: #{tpu_custom_call.1} parent=1 // pred_check_branch
      %73 = sbr.rel (0) target = $region33
    $region32: #{tpu_custom_call.1} parent=1 // pred_region
      %75 = dma.done [#allocation6], 64
    $region33: #{tpu_custom_call.1} parent=1 // pred_fallthru
      _
    // Predicated region
    $region34: #{tpu_custom_call.1} parent=1 // pred_check
      _
    $region35: #{tpu_custom_call.1} parent=1 // pred_check_branch
      %77 = sbr.rel (0) target = $region37
    $region36: #{tpu_custom_call.1} parent=1 // pred_region
      %79 = dma.done [#allocation9], 128
    $region37: #{tpu_custom_call.1} parent=1 // pred_fallthru
      _
    %p81 = scmp.eq.s32.totalorder 0, 0
    // Predicated region
    $region38: #{tpu_custom_call.1} parent=1 // pred_check
      %p82 = pneg %p81
    $region39: #{tpu_custom_call.1} parent=1 // pred_check_branch
      %84 = sbr.rel (%p82) target = $region41
    $region40: #{tpu_custom_call.1} parent=1 // pred_region
      %v85 = vld [vmem:[#allocation7] sm:$0xf]
      %v86 = vld [vmem:[#allocation8] sm:$0xf]
      %v87 = vld [vmem:[#allocation8 + $0x4] sm:$0xf]
      %v88 = vld [vmem:[%s4] sm:$0x1]
      %v90 = vperm.slane %v88, 0
      %v94 = vunpack.c.l.b16 %v86
      %v95 = vunpack.c.l.b16 %v87
      %v96 = vpack.c.b16 %v95, %v94
      %vm98 = vcmask 130048
      %v100 = vsel %vm98, %v85, 0
      %102 = vmatpush.bf16.msra.mxu0 0
      %103 = vmatpush.bf16.msra.mxu0 0
      %104 = vmatpush.bf16.msra.mxu0 0
      %105 = vmatpush.bf16.msra.mxu0 0
      %106 = vmatpush.bf16.msra.mxu0 0
      %107 = vmatpush.bf16.msra.mxu0 0
      %108 = vmatpush.bf16.msra.mxu0 0
      %109 = vmatpush.bf16.msra.mxu0 %v96
      %110 = vmatmul.bf16.gmra.mxu0 %v100
      %v111 = vpop.f32.mrf.mxu0
      %v112 = vadd.f32 %v90, %v111
      %v113 = vpop.f32.mrf.mxu0
      %114 = vdwg.mxu0
      %115 = vst [vmem:[#allocation10] sm:$0xff] %v112
    $region41: #{tpu_custom_call.1} parent=1 // pred_fallthru
      _
    %v116 = vld [vmem:[#allocation10] sm:$0xff]
    %v117 = vld [vmem:[#allocation2] sm:$0xf]
    %v118 = vld [vmem:[#allocation5] sm:$0xf]
    %v119 = vld [vmem:[#allocation5 + $0x4] sm:$0xf]
    %v120 = vld [vmem:[#allocation5 + $0x8] sm:$0xf]
    %v121 = vld [vmem:[#allocation5 + $0xc] sm:$0xf]
    %v122 = vld [vmem:[#allocation5 + $0x10] sm:$0xf]
    %v123 = vld [vmem:[#allocation5 + $0x14] sm:$0xf]
    %v124 = vld [vmem:[#allocation5 + $0x18] sm:$0xf]
    %v125 = vld [vmem:[#allocation5 + $0x1c] sm:$0xf]
    %v126 = vld [vmem:[#allocation5 + $0x20] sm:$0xf]
    %v127 = vld [vmem:[#allocation5 + $0x24] sm:$0xf]
    %v128 = vld [vmem:[#allocation5 + $0x28] sm:$0xf]
    %v129 = vld [vmem:[#allocation5 + $0x2c] sm:$0xf]
    %v130 = vld [vmem:[#allocation5 + $0x30] sm:$0xf]
    %v131 = vld [vmem:[#allocation5 + $0x34] sm:$0xf]
    %v132 = vld [vmem:[#allocation5 + $0x38] sm:$0xf]
    %v133 = vld [vmem:[#allocation5 + $0x3c] sm:$0xf]
    %v150 = vunpack.c.l.b16 %v118
    %v151 = vunpack.c.l.b16 %v119
    %v152 = vunpack.c.l.b16 %v120
    %v153 = vunpack.c.l.b16 %v121
    %v154 = vunpack.c.l.b16 %v122
    %v155 = vunpack.c.l.b16 %v123
    %v156 = vunpack.c.l.b16 %v124
    %v157 = vunpack.c.l.b16 %v125
    %v158 = vunpack.c.l.b16 %v126
    %v159 = vunpack.c.l.b16 %v127
    %v160 = vunpack.c.l.b16 %v128
    %v161 = vunpack.c.l.b16 %v129
    %v162 = vunpack.c.l.b16 %v130
    %v163 = vunpack.c.l.b16 %v131
    %v164 = vunpack.c.l.b16 %v132
    %v165 = vunpack.c.l.b16 %v133
    %v166 = vpack.c.b16 %v151, %v150
    %v167 = vpack.c.b16 %v153, %v152
    %v168 = vpack.c.b16 %v155, %v154
    %v169 = vpack.c.b16 %v157, %v156
    %v170 = vpack.c.b16 %v159, %v158
    %v171 = vpack.c.b16 %v161, %v160
    %v172 = vpack.c.b16 %v163, %v162
    %v173 = vpack.c.b16 %v165, %v164
    %182 = vmatpush.bf16.msra.mxu0 %v173
    %183 = vmatpush.bf16.msra.mxu0 %v172
    %184 = vmatpush.bf16.msra.mxu0 %v171
    %185 = vmatpush.bf16.msra.mxu0 %v170
    %186 = vmatpush.bf16.msra.mxu0 %v169
    %187 = vmatpush.bf16.msra.mxu0 %v168
    %188 = vmatpush.bf16.msra.mxu0 %v167
    %189 = vmatpush.bf16.msra.mxu0 %v166
    %190 = vmatmul.bf16.gmra.mxu0 %v117
    %v191 = vpop.f32.mrf.mxu0
    %v192 = vadd.f32 0.0, %v191
    %v193 = vpop.f32.mrf.mxu0
    %194 = vdwg.mxu0
    %v195 = vadd.f32 %v116, %v192
    %196 = vst [vmem:[#allocation10] sm:$0xff] %v195
    // Predicated region
    $region42: #{tpu_custom_call.1} parent=1 // pred_check
      _
    $region43: #{tpu_custom_call.1} parent=1 // pred_check_branch
      %198 = sbr.rel (0) target = $region45
    $region44: #{tpu_custom_call.1} parent=1 // pred_region
      %200 = vsyncadd [#allocation4], 0
      %s202 = sshll.u32 [#allocation10], 4
      %s203 = int_to_ptr.vmem [resolvable:$true] %s202
      %s204 = sshll.u32 %s5, 4
      %s205 = int_to_ptr.hbm [resolvable:$true] %s204
      %207 = dma.vmem_to_hbm [thread:$0]  %s203, 128, %s205, [#allocation4]
    $region45: #{tpu_custom_call.1} parent=1 // pred_fallthru
      _
    // Predicated region
    $region46: #{tpu_custom_call.1} parent=1 // pred_check
      _
    $region47: #{tpu_custom_call.1} parent=1 // pred_check_branch
      %209 = sbr.rel (0) target = $region49
    $region48: #{tpu_custom_call.1} parent=1 // pred_region
      %211 = dma.done [#allocation4], 128
    $region49: #{tpu_custom_call.1} parent=1 // pred_fallthru
      _
    %212 = vsyncpa [#allocation3], 1
    %213 = vsyncpa [#allocation6], 1
    %214 = vsyncpa [#allocation9], 1
    %215 = vsyncpa [#allocation4], 1

</llo_original>
